<compile_context>
chip_gen: v6e
topology: v6e:2x2x1
jax: 0.10.0
libtpu: 0.0.40
codegen_flags: <defaults>
</compile_context>

<pallas_src>
import jax
import jax.numpy as jnp
from jax.experimental import pallas as pl
from jax.experimental.pallas import tpu as pltpu


def _abs_kernel(x_ref, o_ref):
    # Elementwise |x| on the whole VMEM tile: one VPU op per vreg, so the
    # kernel is purely HBM-bandwidth bound.  (Signed-int abs of INT_MIN wraps,
    # matching torch / jnp semantics.)
    o_ref[...] = jnp.abs(x_ref[...])


def _round_up(a: int, b: int) -> int:
    return ((a + b - 1) // b) * b


def _vmem_budget_bytes() -> int:
    """Scoped-VMEM budget: 3/4 of physical capacity, capped at 64 MiB.

    => ~48 MiB on v7x (64 MiB per TC), 64 MiB on v5e / v6e (128 MiB).
    """
    try:
        info = pltpu.get_tpu_info()
        cap = int(getattr(info, "vmem_capacity_bytes", 64 << 20))
    except Exception:
        cap = 64 << 20  # assume the smallest (v7x per-TC) if the query fails
    return min(64 << 20, (cap * 3) // 4)


def pallas_abs(x: jax.Array, *, target_block_bytes: int = 8 << 20,
               small_fallback_bytes: int = 32 << 10,
               donate_input: bool = False) -> jax.Array:
    """Elementwise |x| (torch.abs forward) as a Pallas TPU kernel."""
    dtype = x.dtype
    n = x.size
    if n == 0:
        return x

    # torch.abs on complex returns the real magnitude -> not a simple
    # elementwise real op; let XLA handle it.
    if jnp.issubdtype(dtype, jnp.complexfloating):
        return jnp.abs(x)

    itemsize = dtype.itemsize

    # Tiny tensors: pallas_call launch + pipeline prologue (a few us) loses to
    # XLA's fused elementwise op.
    if n * itemsize <= small_fallback_bytes:
        return jnp.abs(x)

    # Ragged sizes (n % 128 != 0): the old pad + post-slice path cost ~3x the
    # HBM traffic of the kernel itself, so hand it to XLA (1x traffic).
    # TODO(synk): native ragged path via a 1-D masked BlockSpec if it lowers.
    if n % 128 != 0:
        return jnp.abs(x)

    # ---------- pad-free Pallas path (all typical conv/seq activations) ----
    # Widest lane width (multiple of 128) dividing n -> lane-dense slab; the
    # reshape is a bitcast, no HBM copy.
    lane = 128
    for cand in (8192, 4096, 2048, 1024, 512, 256):
        if n % cand == 0:
            lane = cand
            break
    rows = n // lane
    slab = x.reshape(rows, lane)

    # Sublane packing multiple: 8 for 32-bit, 16 for bf16/fp16, 32 for int8.
    sub_mult = max(8, 32 // max(itemsize, 1))

    # Block sizing: ~target_block_bytes per buffer; in + out, double-buffered
    # => ~4x that must fit the scoped-VMEM budget set below.
    budget = _vmem_budget_bytes()
    block_bytes = min(target_block_bytes, budget // 4)
    br = max(sub_mult,
             (block_bytes // (lane * itemsize)) // sub_mult * sub_mult)
    # Keep >= 2 grid blocks whenever the row axis allows it so both of v7x's
    # TensorCores get work ("parallel" axis -> megacore sharding).
    br = min(br, _round_up(pl.cdiv(rows, 2), sub_mult))

    grid = (pl.cdiv(rows, br),)

    extra = {}
    if donate_input:
        # Reuse the input HBM buffer for the output (halves peak footprint,
        # removes the output allocation).  Opt-in: caller must not rely on x
        # keeping its old contents when the alias is honored.
        extra["input_output_aliases"] = {0: 0}

    out = pl.pallas_call(
        _abs_kernel,
        out_shape=jax.ShapeDtypeStruct((rows, lane), dtype),
        grid_spec=pltpu.PrefetchScalarGridSpec(
            num_scalar_prefetch=0,
            grid=grid,
            in_specs=[pl.BlockSpec((br, lane), lambda i: (i, 0))],
            out_specs=pl.BlockSpec((br, lane), lambda i: (i, 0)),
        ),
        compiler_params=pltpu.CompilerParams(
            dimension_semantics=("parallel",),  # megacore sharding on v7x
            vmem_limit_bytes=budget,            # 48 MiB v7x / 64 MiB v5e,v6e
        ),
        **extra,
    )(slab)

    return out.reshape(x.shape)


if __name__ == "__main__":
    key = jax.random.PRNGKey(0)
    k1, k2, k3, k4 = jax.random.split(key, 4)

    # NCHW conv-activation style input (module spec shape); force the Pallas
    # path (8 KiB would otherwise take the small-tensor fallback).
    x1 = jax.random.normal(k1, (2, 4, 16, 16), dtype=jnp.float32)
    y1 = pallas_abs(x1, small_fallback_bytes=0)
    jax.block_until_ready(y1)
    assert y1.shape == x1.shape and y1.dtype == x1.dtype
    assert jnp.allclose(y1, jnp.abs(x1)), "f32 spec-shape mismatch"

    # Larger activation: exercises the multi-block grid (>= 2 blocks).
    x2 = jax.random.normal(k2, (4, 8, 64, 64), dtype=jnp.float32)
    y2 = pallas_abs(x2)
    jax.block_until_ready(y2)
    assert jnp.allclose(y2, jnp.abs(x2)), "multi-block mismatch"

    # Native sub-32-bit dtype (dtype-aware sublane multiple), no upcast.
    x3 = jax.random.normal(k3, (2, 4, 16, 16), dtype=jnp.bfloat16)
    y3 = pallas_abs(x3, small_fallback_bytes=0)
    jax.block_until_ready(y3)
    assert y3.dtype == jnp.bfloat16 and jnp.array_equal(y3, jnp.abs(x3)), "bf16 mismatch"

    # Ragged size (n % 128 != 0) -> XLA fallback path, still correct.
    x4 = jax.random.normal(k4, (3, 5, 7), dtype=jnp.float32)
    y4 = pallas_abs(x4)
    jax.block_until_ready(y4)
    assert y4.shape == x4.shape and jnp.allclose(y4, jnp.abs(x4)), "ragged mismatch"

    print("KERNEL_OK")
</pallas_src>

<mosaic_0001>
module attributes {stable_mosaic.version = 11 : i64} {
  func.func @_abs_kernel(%arg0: i32, %arg1: memref<8x2048xf32, #tpu.memory_space<vmem>>, %arg2: memref<8x2048xf32, #tpu.memory_space<vmem>>) attributes {dimension_semantics = [#tpu.dimension_semantics<parallel>], iteration_bounds = array<i64: 1>, scalar_prefetch = 0 : i64, scratch_operands = 0 : i64, tpu.core_type = #tpu.core_type<tc>, window_params = [{transform_indices = @transform_0, window_bounds = array<i64: 8, 2048>}, {transform_indices = @transform_1, window_bounds = array<i64: 8, 2048>}]} {
    %c0 = arith.constant 0 : index
    %c0_0 = arith.constant 0 : index
    %0 = vector.load %arg1[%c0, %c0_0] : memref<8x2048xf32, #tpu.memory_space<vmem>>, vector<8x2048xf32>
    %1 = math.absf %0 : vector<8x2048xf32>
    %c0_1 = arith.constant 0 : index
    %c0_2 = arith.constant 0 : index
    %2 = vector.load %arg2[%c0_1, %c0_2] : memref<8x2048xf32, #tpu.memory_space<vmem>>, vector<8x2048xf32>
    tpu.vector_store %arg2[%c0_1, %c0_2], %1 {strides = array<i32>} : memref<8x2048xf32, #tpu.memory_space<vmem>>, vector<8x2048xf32>,
    return
  }
  func.func @transform_0(%arg0: i32) -> (i32, i32) {
    %c0_i32 = arith.constant 0 : i32
    %c0_i32_0 = arith.constant 0 : i32
    return %arg0, %c0_i32 : i32, i32
  }
  func.func @transform_1(%arg0: i32) -> (i32, i32) {
    %c0_i32 = arith.constant 0 : i32
    %c0_i32_0 = arith.constant 0 : i32
    return %arg0, %c0_i32 : i32, i32
  }
}

</mosaic_0001>

<llo_original>
// kernel: tpu_custom_call.1
$region0: #{tpu_custom_call.1}
  #allocation0 [shape = 'u32[]', space=smem, size = 0x4, offset = 0x4, fixed_abs, tag = 'smem constant byte address 0x4 - core index']
  #allocation1 [shape = 'u32[144,128]{1,0:T(1,128)}', space=vmem, size = 0x12000, scoped, tag = 'internal scratch']
  %s0 = inlined_call_operand.hbm [shape: f32[1,2048], index: 0, kind: input, shape index: {}]
  %s1 = inlined_call_operand.hbm [shape: f32[1,2048], index: 1, kind: output, shape index: {}]
  %s2 = sld [smem:[#allocation0]]
  $region18: #{tpu_custom_call.1} parent=0
    _
  %s4 = ssub.s32 1, %s2
  %s5 = scalar_select 0, %s4, %s2
  $region1: #{tpu_custom_call.1} parent=0
    #allocation2 [shape = 'u8[65536]{0}', space=vmem, size = 0x10000, scoped, tag = 'input window, operand 0, single buffered']
    #allocation3 [shape = 's32[1]{0}', space=sflag, size = 0x4, scoped, tag = 'scoped memory for tpu_custom_call.1']
    #allocation4 [shape = 's32[1]{0}', space=sflag, size = 0x4, scoped, tag = 'scoped memory for tpu_custom_call.1']
    #allocation5 [shape = 'u8[65536]{0}', space=vmem, size = 0x10000, scoped, tag = 'output window, operand 0, single buffered']
    %6 = vsyncpa [#allocation3], 0
    %7 = vsyncpa [#allocation4], 0
    // Predicated region
    $region2: #{tpu_custom_call.1} parent=1 // pred_check
      _
    $region3: #{tpu_custom_call.1} parent=1 // pred_check_branch
      %9 = sbr.rel (0) target = $region5
    $region4: #{tpu_custom_call.1} parent=1 // pred_region
      %s11 = ssub.s32 2048, 256
      %12 = vsyncadd [#allocation3], %s11
      %s13 = sshll.u32 [#allocation2], 4
      %s14 = int_to_ptr.vmem [resolvable:$true] %s13
      %19 = dma.hbm_to_vmem [thread:$0]  %s0, 256, %s14, [#allocation3], 256, 256, 16
    $region5: #{tpu_custom_call.1} parent=1 // pred_fallthru
      _
    // Predicated region
    $region6: #{tpu_custom_call.1} parent=1 // pred_check
      _
    $region7: #{tpu_custom_call.1} parent=1 // pred_check_branch
      %21 = sbr.rel (0) target = $region9
    $region8: #{tpu_custom_call.1} parent=1 // pred_region
      %22 = dma.done [#allocation3], 2048
    $region9: #{tpu_custom_call.1} parent=1 // pred_fallthru
      _
    %v23 = vld [vmem:[#allocation2] sm:$0xff]
    %v24 = vld [vmem:[#allocation2 + $0x8] sm:$0xff]
    %v25 = vld [vmem:[#allocation2 + $0x10] sm:$0xff]
    %v26 = vld [vmem:[#allocation2 + $0x18] sm:$0xff]
    %v27 = vld [vmem:[#allocation2 + $0x20] sm:$0xff]
    %v28 = vld [vmem:[#allocation2 + $0x28] sm:$0xff]
    %v29 = vld [vmem:[#allocation2 + $0x30] sm:$0xff]
    %v30 = vld [vmem:[#allocation2 + $0x38] sm:$0xff]
    %v31 = vld [vmem:[#allocation2 + $0x40] sm:$0xff]
    %v32 = vld [vmem:[#allocation2 + $0x48] sm:$0xff]
    %v33 = vld [vmem:[#allocation2 + $0x50] sm:$0xff]
    %v34 = vld [vmem:[#allocation2 + $0x58] sm:$0xff]
    %v35 = vld [vmem:[#allocation2 + $0x60] sm:$0xff]
    %v36 = vld [vmem:[#allocation2 + $0x68] sm:$0xff]
    %v37 = vld [vmem:[#allocation2 + $0x70] sm:$0xff]
    %v38 = vld [vmem:[#allocation2 + $0x78] sm:$0xff]
    %v39 = vand.u32 2147483647, %v23
    %v40 = vand.u32 2147483647, %v24
    %v41 = vand.u32 2147483647, %v25
    %v42 = vand.u32 2147483647, %v26
    %v43 = vand.u32 2147483647, %v27
    %v44 = vand.u32 2147483647, %v28
    %v45 = vand.u32 2147483647, %v29
    %v46 = vand.u32 2147483647, %v30
    %v47 = vand.u32 2147483647, %v31
    %v48 = vand.u32 2147483647, %v32
    %v49 = vand.u32 2147483647, %v33
    %v50 = vand.u32 2147483647, %v34
    %v51 = vand.u32 2147483647, %v35
    %v52 = vand.u32 2147483647, %v36
    %v53 = vand.u32 2147483647, %v37
    %v54 = vand.u32 2147483647, %v38
    %55 = vst [vmem:[#allocation5] sm:$0xff] %v39
    %56 = vst [vmem:[#allocation5 + $0x8] sm:$0xff] %v40
    %57 = vst [vmem:[#allocation5 + $0x10] sm:$0xff] %v41
    %58 = vst [vmem:[#allocation5 + $0x18] sm:$0xff] %v42
    %59 = vst [vmem:[#allocation5 + $0x20] sm:$0xff] %v43
    %60 = vst [vmem:[#allocation5 + $0x28] sm:$0xff] %v44
    %61 = vst [vmem:[#allocation5 + $0x30] sm:$0xff] %v45
    %62 = vst [vmem:[#allocation5 + $0x38] sm:$0xff] %v46
    %63 = vst [vmem:[#allocation5 + $0x40] sm:$0xff] %v47
    %64 = vst [vmem:[#allocation5 + $0x48] sm:$0xff] %v48
    %65 = vst [vmem:[#allocation5 + $0x50] sm:$0xff] %v49
    %66 = vst [vmem:[#allocation5 + $0x58] sm:$0xff] %v50
    %67 = vst [vmem:[#allocation5 + $0x60] sm:$0xff] %v51
    %68 = vst [vmem:[#allocation5 + $0x68] sm:$0xff] %v52
    %69 = vst [vmem:[#allocation5 + $0x70] sm:$0xff] %v53
    %70 = vst [vmem:[#allocation5 + $0x78] sm:$0xff] %v54
    // Predicated region
    $region10: #{tpu_custom_call.1} parent=1 // pred_check
      _
    $region11: #{tpu_custom_call.1} parent=1 // pred_check_branch
      %72 = sbr.rel (0) target = $region13
    $region12: #{tpu_custom_call.1} parent=1 // pred_region
      %s74 = ssub.s32 2048, 256
      %75 = vsyncadd [#allocation4], %s74
      %s76 = sshll.u32 [#allocation5], 4
      %s77 = int_to_ptr.vmem [resolvable:$true] %s76
      %82 = dma.vmem_to_hbm [thread:$0]  %s77, 256, %s1, [#allocation4], 256, 256, 16
    $region13: #{tpu_custom_call.1} parent=1 // pred_fallthru
      _
    // Predicated region
    $region14: #{tpu_custom_call.1} parent=1 // pred_check
      _
    $region15: #{tpu_custom_call.1} parent=1 // pred_check_branch
      %84 = sbr.rel (0) target = $region17
    $region16: #{tpu_custom_call.1} parent=1 // pred_region
      %85 = dma.done [#allocation4], 2048
    $region17: #{tpu_custom_call.1} parent=1 // pred_fallthru
      _
    %86 = vsyncpa [#allocation3], 1
    %87 = vsyncpa [#allocation4], 1

</llo_original>
